<compile_context>
chip_gen: v6e
topology: v6e:2x2x1
jax: 0.10.0
libtpu: 0.0.40
codegen_flags: <defaults>
</compile_context>

<pallas_src>
import jax
import jax.numpy as jnp
from jax.experimental import pallas as pl
from jax.experimental.pallas import tpu as pltpu

F_IN = 2
F_OUT = 2

_FP16_MIN_NORMAL = 6.103515625e-05   # 2**-14
_FP16_MAX = 65504.0
_TWO24 = 16777216.0                  # 2**24
_TWO23 = 8388608.0                   # 2**23


def _fp16_round_trip(v):
    """Exact emulation of float32 -> float16 (round-to-nearest-even) -> float32."""
    absv = jnp.abs(v)

    # Normal-range path: round the fp32 mantissa to 10 bits (drop 13) with RNE.
    bits = pltpu.bitcast(absv, jnp.int32)
    lsb = (bits >> 13) & jnp.int32(1)
    rounded = (bits + jnp.int32(0x0FFF) + lsb) & jnp.int32(-8192)   # -8192 == ~0x1FFF
    r_norm = pltpu.bitcast(rounded, jnp.float32)
    # Anything that rounded past fp16 max (>= 65520 pre-round) becomes +inf.
    r_norm = jnp.where(r_norm > jnp.float32(_FP16_MAX), jnp.float32(jnp.inf), r_norm)

    # Subnormal-range path (|v| < 2^-14): quantize to multiples of 2^-24 with RNE
    # via the add/subtract-2^23 magic-constant trick (power-of-two scales are exact).
    scaled = absv * jnp.float32(_TWO24)
    r_sub = ((scaled + jnp.float32(_TWO23)) - jnp.float32(_TWO23)) * jnp.float32(1.0 / _TWO24)

    r = jnp.where(absv < jnp.float32(_FP16_MIN_NORMAL), r_sub, r_norm)
    return jnp.where(v < 0.0, -r, r)


def _fused_kernel(x_ref, w_ref, b_ref, o_ref):
    # x_ref: (N, 2) f32
    # w_ref: (6, 2) f32 = [Wg^T ; Wa^T ; Wb^T] stacked row-wise ([in, out] layout)
    # b_ref: (3, 2) f32 = [bg ; ba ; bb]
    x = x_ref[...]
    w = w_ref[...]
    b = b_ref[...]

    def linear2(v, layer):
        # out = v @ W^T + b as two broadcasted VPU multiply-adds (no MXU).
        r0 = w[2 * layer: 2 * layer + 1, :]       # (1, 2)
        r1 = w[2 * layer + 1: 2 * layer + 2, :]   # (1, 2)
        bl = b[layer: layer + 1, :]               # (1, 2)
        return v[:, 0:1] * r0 + v[:, 1:2] * r1 + bl

    y = linear2(x, 0)            # G.l1  (first call)
    y = _fp16_round_trip(y)      # .to(float16); G up-casts back to float32
    y = linear2(y, 0)            # G.l1  (second call, same weights)
    y = linear2(y, 1)            # A.l1  (checkpoint is identity in forward)
    o_ref[...] = linear2(y, 2)   # B.l1


def main_with_module_multiple_calls(x, params):
    """Forward pass of MainWithModuleMultipleCalls as a single fused Pallas kernel."""
    wg, bg = params["g.l1"]
    wa, ba = params["b.a.l1"]
    wb, bb = params["b.l1"]

    # Pack weights (pre-transposed to [in, out]) and biases into single arrays so
    # the kernel takes 3 inputs instead of 7.
    w_packed = jnp.concatenate([wg.T, wa.T, wb.T], axis=0)   # (6, 2)
    b_packed = jnp.stack([bg, ba, bb], axis=0)               # (3, 2)

    n = x.shape[0]
    return pl.pallas_call(
        _fused_kernel,
        out_shape=jax.ShapeDtypeStruct((n, F_OUT), jnp.float32),
        in_specs=[
            pl.BlockSpec(memory_space=pltpu.MemorySpace.VMEM),
            pl.BlockSpec(memory_space=pltpu.MemorySpace.VMEM),
            pl.BlockSpec(memory_space=pltpu.MemorySpace.VMEM),
        ],
        out_specs=pl.BlockSpec(memory_space=pltpu.MemorySpace.VMEM),
    )(x, w_packed, b_packed)


def _init_linear(key, fan_in, fan_out):
    # mimic torch.nn.Linear default init: U(-1/sqrt(fan_in), 1/sqrt(fan_in))
    kw, kb = jax.random.split(key)
    bound = 1.0 / float(fan_in) ** 0.5
    w = jax.random.uniform(kw, (fan_out, fan_in), jnp.float32, -bound, bound)
    b = jax.random.uniform(kb, (fan_out,), jnp.float32, -bound, bound)
    return w, b


def _reference(x, params):
    wg, bg = params["g.l1"]
    wa, ba = params["b.a.l1"]
    wb, bb = params["b.l1"]
    y = x @ wg.T + bg
    y = y.astype(jnp.float16).astype(jnp.float32)   # real fp16 round trip
    y = y @ wg.T + bg
    y = y @ wa.T + ba
    return y @ wb.T + bb


if __name__ == "__main__":
    key = jax.random.PRNGKey(0)
    kx, kg, ka, kb = jax.random.split(key, 4)

    N = 8  # batch
    x = jax.random.normal(kx, (N, F_IN), jnp.float32)

    params = {
        "g.l1": _init_linear(kg, F_IN, F_OUT),
        "b.a.l1": _init_linear(ka, F_IN, F_OUT),
        "b.l1": _init_linear(kb, F_IN, F_OUT),
    }

    fwd = jax.jit(main_with_module_multiple_calls)
    out = jax.block_until_ready(fwd(x, params))

    ref = _reference(x, params)
    assert out.shape == (N, F_OUT) and out.dtype == jnp.float32
    assert jnp.allclose(out, ref, atol=1e-5, rtol=1e-5), "mismatch vs reference"

    print("KERNEL_OK")
</pallas_src>

<mosaic_0001>
module attributes {stable_mosaic.version = 11 : i64} {
  func.func @_fused_kernel(%arg0: memref<8x2xf32, #tpu.memory_space<vmem>>, %arg1: memref<6x2xf32, #tpu.memory_space<vmem>>, %arg2: memref<3x2xf32, #tpu.memory_space<vmem>>, %arg3: memref<8x2xf32, #tpu.memory_space<vmem>>) attributes {dimension_semantics = [], scalar_prefetch = 0 : i64, scratch_operands = 0 : i64, tpu.core_type = #tpu.core_type<tc>} {
    %c0 = arith.constant 0 : index
    %c0_0 = arith.constant 0 : index
    %0 = vector.load %arg0[%c0, %c0_0] : memref<8x2xf32, #tpu.memory_space<vmem>>, vector<8x2xf32>
    %c0_1 = arith.constant 0 : index
    %c0_2 = arith.constant 0 : index
    %1 = vector.load %arg1[%c0_1, %c0_2] : memref<6x2xf32, #tpu.memory_space<vmem>>, vector<6x2xf32>
    %c0_3 = arith.constant 0 : index
    %c0_4 = arith.constant 0 : index
    %2 = vector.load %arg2[%c0_3, %c0_4] : memref<3x2xf32, #tpu.memory_space<vmem>>, vector<3x2xf32>
    %3 = vector.extract_strided_slice %1 {offsets = [0, 0], sizes = [1, 2], strides = [1, 1]} : vector<6x2xf32> to vector<1x2xf32>
    %4 = vector.extract_strided_slice %1 {offsets = [1, 0], sizes = [1, 2], strides = [1, 1]} : vector<6x2xf32> to vector<1x2xf32>
    %5 = vector.extract_strided_slice %2 {offsets = [0, 0], sizes = [1, 2], strides = [1, 1]} : vector<3x2xf32> to vector<1x2xf32>
    %6 = vector.extract_strided_slice %0 {offsets = [0, 0], sizes = [8, 1], strides = [1, 1]} : vector<8x2xf32> to vector<8x1xf32>
    %7 = vector.broadcast %6 : vector<8x1xf32> to vector<8x2xf32>
    %8 = vector.broadcast %3 : vector<1x2xf32> to vector<8x2xf32>
    %9 = arith.mulf %7, %8 : vector<8x2xf32>
    %10 = vector.extract_strided_slice %0 {offsets = [0, 1], sizes = [8, 1], strides = [1, 1]} : vector<8x2xf32> to vector<8x1xf32>
    %11 = vector.broadcast %10 : vector<8x1xf32> to vector<8x2xf32>
    %12 = vector.broadcast %4 : vector<1x2xf32> to vector<8x2xf32>
    %13 = arith.mulf %11, %12 : vector<8x2xf32>
    %14 = arith.addf %9, %13 : vector<8x2xf32>
    %15 = vector.broadcast %5 : vector<1x2xf32> to vector<8x2xf32>
    %16 = arith.addf %14, %15 : vector<8x2xf32>
    %17 = math.absf %16 : vector<8x2xf32>
    %18 = tpu.bitcast %17 : vector<8x2xf32> -> vector<8x2xi32>
    %c13_i32 = arith.constant 13 : i32
    %19 = vector.broadcast %c13_i32 : i32 to vector<8x2xi32>
    %20 = arith.shrsi %18, %19 : vector<8x2xi32>
    %c1_i32 = arith.constant 1 : i32
    %21 = vector.broadcast %c1_i32 : i32 to vector<8x2xi32>
    %22 = arith.andi %20, %21 : vector<8x2xi32>
    %c4095_i32 = arith.constant 4095 : i32
    %23 = vector.broadcast %c4095_i32 : i32 to vector<8x2xi32>
    %24 = arith.addi %18, %23 : vector<8x2xi32>
    %25 = arith.addi %24, %22 : vector<8x2xi32>
    %c-8192_i32 = arith.constant -8192 : i32
    %26 = vector.broadcast %c-8192_i32 : i32 to vector<8x2xi32>
    %27 = arith.andi %25, %26 : vector<8x2xi32>
    %28 = tpu.bitcast %27 : vector<8x2xi32> -> vector<8x2xf32>
    %cst = arith.constant 6.550400e+04 : f32
    %29 = vector.broadcast %cst : f32 to vector<8x2xf32>
    %30 = arith.cmpf ogt, %28, %29 : vector<8x2xf32>
    %cst_5 = arith.constant 0x7F800000 : f32
    %31 = vector.broadcast %cst_5 : f32 to vector<8x2xf32>
    %32 = arith.select %30, %31, %28 : vector<8x2xi1>, vector<8x2xf32>
    %cst_6 = arith.constant 0x4B800000 : f32
    %33 = vector.broadcast %cst_6 : f32 to vector<8x2xf32>
    %34 = arith.mulf %17, %33 : vector<8x2xf32>
    %cst_7 = arith.constant 0x4B000000 : f32
    %35 = vector.broadcast %cst_7 : f32 to vector<8x2xf32>
    %36 = arith.addf %34, %35 : vector<8x2xf32>
    %cst_8 = arith.constant 0x4B000000 : f32
    %37 = vector.broadcast %cst_8 : f32 to vector<8x2xf32>
    %38 = arith.subf %36, %37 : vector<8x2xf32>
    %cst_9 = arith.constant 5.96046448E-8 : f32
    %39 = vector.broadcast %cst_9 : f32 to vector<8x2xf32>
    %40 = arith.mulf %38, %39 : vector<8x2xf32>
    %cst_10 = arith.constant 6.10351563E-5 : f32
    %41 = vector.broadcast %cst_10 : f32 to vector<8x2xf32>
    %42 = arith.cmpf olt, %17, %41 : vector<8x2xf32>
    %43 = arith.select %42, %40, %32 : vector<8x2xi1>, vector<8x2xf32>
    %cst_11 = arith.constant 0.000000e+00 : f32
    %44 = vector.broadcast %cst_11 : f32 to vector<8x2xf32>
    %45 = arith.cmpf olt, %16, %44 : vector<8x2xf32>
    %cst_12 = arith.constant 0.000000e+00 : f32
    %46 = vector.broadcast %cst_12 : f32 to vector<8x2xf32>
    %47 = arith.subf %46, %43 : vector<8x2xf32>
    %48 = arith.select %45, %47, %43 : vector<8x2xi1>, vector<8x2xf32>
    %49 = vector.extract_strided_slice %1 {offsets = [0, 0], sizes = [1, 2], strides = [1, 1]} : vector<6x2xf32> to vector<1x2xf32>
    %50 = vector.extract_strided_slice %1 {offsets = [1, 0], sizes = [1, 2], strides = [1, 1]} : vector<6x2xf32> to vector<1x2xf32>
    %51 = vector.extract_strided_slice %2 {offsets = [0, 0], sizes = [1, 2], strides = [1, 1]} : vector<3x2xf32> to vector<1x2xf32>
    %52 = vector.extract_strided_slice %48 {offsets = [0, 0], sizes = [8, 1], strides = [1, 1]} : vector<8x2xf32> to vector<8x1xf32>
    %53 = vector.broadcast %52 : vector<8x1xf32> to vector<8x2xf32>
    %54 = vector.broadcast %49 : vector<1x2xf32> to vector<8x2xf32>
    %55 = arith.mulf %53, %54 : vector<8x2xf32>
    %56 = vector.extract_strided_slice %48 {offsets = [0, 1], sizes = [8, 1], strides = [1, 1]} : vector<8x2xf32> to vector<8x1xf32>
    %57 = vector.broadcast %56 : vector<8x1xf32> to vector<8x2xf32>
    %58 = vector.broadcast %50 : vector<1x2xf32> to vector<8x2xf32>
    %59 = arith.mulf %57, %58 : vector<8x2xf32>
    %60 = arith.addf %55, %59 : vector<8x2xf32>
    %61 = vector.broadcast %51 : vector<1x2xf32> to vector<8x2xf32>
    %62 = arith.addf %60, %61 : vector<8x2xf32>
    %63 = vector.extract_strided_slice %1 {offsets = [2, 0], sizes = [1, 2], strides = [1, 1]} : vector<6x2xf32> to vector<1x2xf32>
    %64 = vector.extract_strided_slice %1 {offsets = [3, 0], sizes = [1, 2], strides = [1, 1]} : vector<6x2xf32> to vector<1x2xf32>
    %65 = vector.extract_strided_slice %2 {offsets = [1, 0], sizes = [1, 2], strides = [1, 1]} : vector<3x2xf32> to vector<1x2xf32>
    %66 = vector.extract_strided_slice %62 {offsets = [0, 0], sizes = [8, 1], strides = [1, 1]} : vector<8x2xf32> to vector<8x1xf32>
    %67 = vector.broadcast %66 : vector<8x1xf32> to vector<8x2xf32>
    %68 = vector.broadcast %63 : vector<1x2xf32> to vector<8x2xf32>
    %69 = arith.mulf %67, %68 : vector<8x2xf32>
    %70 = vector.extract_strided_slice %62 {offsets = [0, 1], sizes = [8, 1], strides = [1, 1]} : vector<8x2xf32> to vector<8x1xf32>
    %71 = vector.broadcast %70 : vector<8x1xf32> to vector<8x2xf32>
    %72 = vector.broadcast %64 : vector<1x2xf32> to vector<8x2xf32>
    %73 = arith.mulf %71, %72 : vector<8x2xf32>
    %74 = arith.addf %69, %73 : vector<8x2xf32>
    %75 = vector.broadcast %65 : vector<1x2xf32> to vector<8x2xf32>
    %76 = arith.addf %74, %75 : vector<8x2xf32>
    %77 = vector.extract_strided_slice %1 {offsets = [4, 0], sizes = [1, 2], strides = [1, 1]} : vector<6x2xf32> to vector<1x2xf32>
    %78 = vector.extract_strided_slice %1 {offsets = [5, 0], sizes = [1, 2], strides = [1, 1]} : vector<6x2xf32> to vector<1x2xf32>
    %79 = vector.extract_strided_slice %2 {offsets = [2, 0], sizes = [1, 2], strides = [1, 1]} : vector<3x2xf32> to vector<1x2xf32>
    %80 = vector.extract_strided_slice %76 {offsets = [0, 0], sizes = [8, 1], strides = [1, 1]} : vector<8x2xf32> to vector<8x1xf32>
    %81 = vector.broadcast %80 : vector<8x1xf32> to vector<8x2xf32>
    %82 = vector.broadcast %77 : vector<1x2xf32> to vector<8x2xf32>
    %83 = arith.mulf %81, %82 : vector<8x2xf32>
    %84 = vector.extract_strided_slice %76 {offsets = [0, 1], sizes = [8, 1], strides = [1, 1]} : vector<8x2xf32> to vector<8x1xf32>
    %85 = vector.broadcast %84 : vector<8x1xf32> to vector<8x2xf32>
    %86 = vector.broadcast %78 : vector<1x2xf32> to vector<8x2xf32>
    %87 = arith.mulf %85, %86 : vector<8x2xf32>
    %88 = arith.addf %83, %87 : vector<8x2xf32>
    %89 = vector.broadcast %79 : vector<1x2xf32> to vector<8x2xf32>
    %90 = arith.addf %88, %89 : vector<8x2xf32>
    %c0_13 = arith.constant 0 : index
    %c0_14 = arith.constant 0 : index
    %91 = vector.load %arg3[%c0_13, %c0_14] : memref<8x2xf32, #tpu.memory_space<vmem>>, vector<8x2xf32>
    tpu.vector_store %arg3[%c0_13, %c0_14], %90 {strides = array<i32>} : memref<8x2xf32, #tpu.memory_space<vmem>>, vector<8x2xf32>,
    return
  }
}

</mosaic_0001>

<llo_original>
// kernel: main_with_module_multiple_calls.1
$region0: #{main_with_module_multiple_calls.1}
  #allocation0 [shape = 'u32[]', space=smem, size = 0x4, offset = 0x4, fixed_abs, tag = 'smem constant byte address 0x4 - core index']
  #allocation1 [shape = 'u32[144,128]{1,0:T(1,128)}', space=vmem, size = 0x12000, scoped, tag = 'internal scratch']
  %s0 = inlined_call_operand.vmem [shape: f32[8,2], index: 0, kind: input, shape index: {}]
  %s1 = inlined_call_operand.vmem [shape: f32[6,2], index: 1, kind: input, shape index: {}]
  %s2 = inlined_call_operand.vmem [shape: f32[3,2], index: 2, kind: input, shape index: {}]
  %s3 = inlined_call_operand.vmem [shape: f32[8,2], index: 3, kind: output, shape index: {}]
  %s4 = sld [smem:[#allocation0]]
  $region22: #{main_with_module_multiple_calls.1} parent=0
    _
  %s6 = ssub.s32 1, %s4
  %s7 = scalar_select 0, %s6, %s4
  // Predicated region
  $region2: #{main_with_module_multiple_calls.1} parent=0 // pred_check
    _
  $region3: #{main_with_module_multiple_calls.1} parent=0 // pred_check_branch
    %9 = sbr.rel (0) target = $region5
  $region4: #{main_with_module_multiple_calls.1} parent=0 // pred_region
    _
  $region5: #{main_with_module_multiple_calls.1} parent=0 // pred_fallthru
    _
  // Predicated region
  $region6: #{main_with_module_multiple_calls.1} parent=0 // pred_check
    _
  $region7: #{main_with_module_multiple_calls.1} parent=0 // pred_check_branch
    %11 = sbr.rel (0) target = $region9
  $region8: #{main_with_module_multiple_calls.1} parent=0 // pred_region
    _
  $region9: #{main_with_module_multiple_calls.1} parent=0 // pred_fallthru
    _
  // Predicated region
  $region10: #{main_with_module_multiple_calls.1} parent=0 // pred_check
    _
  $region11: #{main_with_module_multiple_calls.1} parent=0 // pred_check_branch
    %13 = sbr.rel (0) target = $region13
  $region12: #{main_with_module_multiple_calls.1} parent=0 // pred_region
    _
  $region13: #{main_with_module_multiple_calls.1} parent=0 // pred_fallthru
    _
  %v14 = vld [vmem:[%s0] sm:$0xff]
  %v15 = vld [vmem:[%s1] sm:$0x3f]
  %v16 = vld [vmem:[%s2] sm:$0x7]
  %18 = vset.pattern.permute.xlu0 0
  %19 = vperm.xlu0 %18, %v14
  %v20 = vpop.permute.xlu0 %19
  %v22 = vlaneseq
  %v23 = vshrl.u32 %v22, 7
  %v24 = vsub.s32 0, %v23
  %v25 = vrot.slane %v15, %v24
  %v26 = vmul.f32 %v20, %v25
  %27 = vset.pattern.permute.xlu0 1
  %28 = vperm.xlu0 %27, %v14
  %v29 = vpop.permute.xlu0 %28
  %v31 = vlaneseq
  %v32 = vshrl.u32 %v31, 7
  %v33 = vsub.s32 1, %v32
  %v34 = vrot.slane %v15, %v33
  %v35 = vmul.f32 %v29, %v34
  %v36 = vadd.f32 %v26, %v35
  %v37 = vlaneseq
  %v38 = vshrl.u32 %v37, 7
  %v39 = vsub.s32 0, %v38
  %v40 = vrot.slane %v16, %v39
  %v41 = vadd.f32 %v36, %v40
  %v42 = vand.u32 2147483647, %v41
  %v44 = vshra.s32 %v42, 13
  %v45 = vand.u32 %v44, 1
  %v46 = vadd.s32 %v42, 4095
  %v47 = vadd.s32 %v46, %v45
  %v48 = vand.u32 %v47, 4294959104
  %vm50 = vcmp.gt.f32.partialorder %v48, 65504.0
  %v51 = vsel %vm50, inf, %v48
  %v52 = vmul.f32 %v42, 16777216.0
  %v53 = vadd.f32 %v52, 8388608.0
  %v54 = vsub.f32 %v53, 8388608.0
  %v55 = vmul.f32 %v54, 5.9604645e-08
  %vm56 = vcmp.lt.f32.partialorder %v42, 6.1035156e-05
  %v57 = vsel %vm56, %v55, %v51
  %vm58 = vcmp.lt.f32.partialorder %v41, 0.0
  %v59 = vsub.f32 0.0, %v57
  %v60 = vsel %vm58, %v59, %v57
  %62 = vset.pattern.permute.xlu0 0
  %63 = vperm.xlu0 %62, %v60
  %v64 = vpop.permute.xlu0 %63
  %v66 = vmul.f32 %v64, %v25
  %67 = vset.pattern.permute.xlu0 1
  %68 = vperm.xlu0 %67, %v60
  %v69 = vpop.permute.xlu0 %68
  %v71 = vmul.f32 %v69, %v34
  %v72 = vadd.f32 %v66, %v71
  %v73 = vadd.f32 %v72, %v40
  %75 = vset.pattern.permute.xlu0 0
  %76 = vperm.xlu0 %75, %v73
  %v77 = vpop.permute.xlu0 %76
  %v79 = vlaneseq
  %v80 = vshrl.u32 %v79, 7
  %v81 = vsub.s32 2, %v80
  %v82 = vrot.slane %v15, %v81
  %v83 = vmul.f32 %v77, %v82
  %84 = vset.pattern.permute.xlu0 1
  %85 = vperm.xlu0 %84, %v73
  %v86 = vpop.permute.xlu0 %85
  %v88 = vlaneseq
  %v89 = vshrl.u32 %v88, 7
  %v90 = vsub.s32 3, %v89
  %v91 = vrot.slane %v15, %v90
  %v92 = vmul.f32 %v86, %v91
  %v93 = vadd.f32 %v83, %v92
  %v94 = vlaneseq
  %v95 = vshrl.u32 %v94, 7
  %v96 = vsub.s32 1, %v95
  %v97 = vrot.slane %v16, %v96
  %v98 = vadd.f32 %v93, %v97
  %100 = vset.pattern.permute.xlu0 0
  %101 = vperm.xlu0 %100, %v98
  %v102 = vpop.permute.xlu0 %101
  %v104 = vlaneseq
  %v105 = vshrl.u32 %v104, 7
  %v106 = vsub.s32 4, %v105
  %v107 = vrot.slane %v15, %v106
  %v108 = vmul.f32 %v102, %v107
  %109 = vset.pattern.permute.xlu0 1
  %110 = vperm.xlu0 %109, %v98
  %v111 = vpop.permute.xlu0 %110
  %v113 = vlaneseq
  %v114 = vshrl.u32 %v113, 7
  %v115 = vsub.s32 5, %v114
  %v116 = vrot.slane %v15, %v115
  %v117 = vmul.f32 %v111, %v116
  %v118 = vadd.f32 %v108, %v117
  %v119 = vlaneseq
  %v120 = vshrl.u32 %v119, 7
  %v121 = vsub.s32 2, %v120
  %v122 = vrot.slane %v16, %v121
  %v123 = vadd.f32 %v118, %v122
  %vm124 = vcmask 15360
  %125 = vst.msk [vmem:[%s3] sm:$0xff] %vm124, %v123
  // Predicated region
  $region14: #{main_with_module_multiple_calls.1} parent=0 // pred_check
    _
  $region15: #{main_with_module_multiple_calls.1} parent=0 // pred_check_branch
    %127 = sbr.rel (0) target = $region17
  $region16: #{main_with_module_multiple_calls.1} parent=0 // pred_region
    _
  $region17: #{main_with_module_multiple_calls.1} parent=0 // pred_fallthru
    _
  // Predicated region
  $region18: #{main_with_module_multiple_calls.1} parent=0 // pred_check
    _
  $region19: #{main_with_module_multiple_calls.1} parent=0 // pred_check_branch
    %129 = sbr.rel (0) target = $region21
  $region20: #{main_with_module_multiple_calls.1} parent=0 // pred_region
    _
  $region21: #{main_with_module_multiple_calls.1} parent=0 // pred_fallthru
    _

</llo_original>
